<compile_context>
chip_gen: v7x
topology: tpu7x:2x2x1
jax: 0.10.0
libtpu: 0.0.40
codegen_flags: <defaults>
</compile_context>

<pallas_src>
import functools

import jax
import jax.numpy as jnp
from jax import lax
from jax.experimental import pallas as pl
from jax.experimental.pallas import tpu as pltpu

IN_F = 10
HID = 20
OUT_F = 1

_LANE = 128
# Conservative per-batch-row VMEM footprint (f32):
#   x pipeline buffers : 2 x 512 B  ([tb, 10] tile is lane-padded to 128 lanes)
#   x operand in vregs : ~512 B     (materialized tile feeding the MXU)
#   h + fused temps    : ~3 x 96 B  ([20->24, tb] f32 intermediates)
#   out pipeline bufs  : 2 x 32 B   ([1->8, tb] tile)
#   relayout / misc    : ~128 B
_VMEM_BYTES_PER_ROW = 2048


def _round_up(x, m):
    return (x + m - 1) // m * m


def _round_down_at_least(x, m):
    return max(m, (x // m) * m)


def _mlp_kernel(x_ref, w1_ref, b1_ref, w2_ref, b2_ref, o_ref, *, mxu_dtype):
    # x_ref : [tb, 10]  native batch-major activation tile (only grid-scaled input)
    # w1_ref: [20, 10]  PyTorch nn.Linear layout (out x in), VMEM resident
    # b1_ref: [20, 1]   VMEM resident
    # w2_ref: [20, 1]   fc2 weight column, VMEM resident
    # b2_ref: [1]       SMEM scalar
    # o_ref : [1, tb]   lane-dense output tile (batch on lanes)
    x = x_ref[...]
    w1 = w1_ref[...]
    if mxu_dtype != jnp.float32:
        # Single-pass bf16 MXU operands, f32 accumulate (opt-in; see net_forward).
        x = x.astype(mxu_dtype)
        w1 = w1.astype(mxu_dtype)
    # fc1 as an NT contraction on the MXU: h[j, b] = sum_k w1[j, k] * x[b, k].
    # The batch->lanes relayout happens inside the matmul lowering (no wrapper
    # transpose of the full activation, no extra HBM traffic).
    h = lax.dot_general(w1, x,
                        dimension_numbers=(((1,), (1,)), ((), ())),
                        preferred_element_type=jnp.float32)        # [20, tb]
    h = jnp.maximum(h + b1_ref[...], 0.0)                          # bias + ReLU (VPU)
    # fc2 (N=1, K=20): VPU multiply + sublane (XLU) reduce; no degenerate MXU matmul.
    y = jnp.sum(h * w2_ref[...], axis=0, keepdims=True)            # [1, tb]
    o_ref[...] = (y + b2_ref[0]).astype(o_ref.dtype)


def net_forward(x, w1, b1, w2, b2, *, tb=32768, mxu_dtype=jnp.float32):
    """Forward pass of Net.

    x : [B, 10] f32 (native PyTorch layout, fed to the kernel as-is)
    w1: [20, 10] f32 (PyTorch nn.Linear layout, out x in)
    b1: [20]     f32
    w2: [1, 20]  f32
    b2: [1]      f32
    mxu_dtype: jnp.float32 (exact, default; required on v5e) or jnp.bfloat16
               (fewer MXU passes, ~1e-2 accuracy; worthwhile on v7x/v6e).
    returns [B, 1] f32
    """
    B = x.shape[0]
    assert x.shape[1] == IN_F, x.shape
    x = x.astype(jnp.float32)

    # --- VMEM budget & batch-tile selection -------------------------------
    try:
        vmem_cap = int(pltpu.get_tpu_info().vmem_capacity_bytes)
    except Exception:
        vmem_cap = 64 * 1024 * 1024          # conservative (v7x-sized) fallback
    # Use at most half of physical VMEM, never more than 64 MiB.
    vmem_budget = min(vmem_cap // 2, 64 * 1024 * 1024)

    tb = _round_up(int(tb), _LANE)                                   # lane multiple
    tb_vmem = _round_down_at_least(
        (vmem_budget - (1 << 20)) // _VMEM_BYTES_PER_ROW, _LANE)     # VMEM cap
    tb = min(tb, tb_vmem)
    # Keep >= 2 grid steps for large B so v7x's two TensorCores both get work.
    tb = min(tb, _round_up(pl.cdiv(B, 2), _LANE))
    tb = max(tb, _LANE)

    num_blocks = pl.cdiv(B, tb)   # ragged last block: reads padded, writes masked

    # --- Parameter packing --------------------------------------------------
    b1c = b1.reshape(HID, 1).astype(jnp.float32)                     # [20, 1]
    w2c = w2.reshape(HID, 1).astype(jnp.float32)                     # [20, 1]
    b2s = b2.reshape(1).astype(jnp.float32)                          # [1]  (SMEM)

    flops = 2 * B * (IN_F * HID + HID)
    bytes_accessed = (x.size + B + w1.size + b1.size + w2.size + b2.size) * 4

    kernel = functools.partial(_mlp_kernel, mxu_dtype=mxu_dtype)

    out = pl.pallas_call(
        kernel,
        out_shape=jax.ShapeDtypeStruct((1, B), jnp.float32),
        grid=(num_blocks,),
        in_specs=[
            # Native-layout activation tile: the only array that scales with the grid.
            pl.BlockSpec((tb, IN_F), lambda i: (i, 0)),
            # Weights/biases: constant index_map -> VMEM resident, no re-DMA.
            pl.BlockSpec((HID, IN_F), lambda i: (0, 0)),
            pl.BlockSpec((HID, 1), lambda i: (0, 0)),
            pl.BlockSpec((HID, 1), lambda i: (0, 0)),
            # fc2 bias as an SMEM scalar (no VMEM tile / (8,128) padding).
            pl.BlockSpec(memory_space=pltpu.MemorySpace.SMEM),
        ],
        out_specs=pl.BlockSpec((1, tb), lambda i: (0, i)),            # lane-dense
        compiler_params=pltpu.CompilerParams(
            dimension_semantics=("parallel",),                        # megacore on v7x
            vmem_limit_bytes=vmem_budget),
        cost_estimate=pl.CostEstimate(
            flops=flops, transcendentals=0, bytes_accessed=bytes_accessed),
    )(x, w1.astype(jnp.float32), b1c, w2c, b2s)

    return out.reshape(B, OUT_F)                                      # free reshape


def init_params(key):
    """Deterministic init mirroring PyTorch nn.Linear defaults, PyTorch layout."""
    k1, k2, k3, k4 = jax.random.split(key, 4)
    lim1 = 1.0 / jnp.sqrt(jnp.float32(IN_F))
    lim2 = 1.0 / jnp.sqrt(jnp.float32(HID))
    w1 = jax.random.uniform(k1, (HID, IN_F), jnp.float32, -lim1, lim1)   # [20,10]
    b1 = jax.random.uniform(k2, (HID,), jnp.float32, -lim1, lim1)        # [20]
    w2 = jax.random.uniform(k3, (OUT_F, HID), jnp.float32, -lim2, lim2)  # [1,20]
    b2 = jax.random.uniform(k4, (OUT_F,), jnp.float32, -lim2, lim2)      # [1]
    return w1, b1, w2, b2


if __name__ == "__main__":
    key = jax.random.PRNGKey(0)
    kx, kp = jax.random.split(key)
    w1, b1, w2, b2 = init_params(kp)

    def reference(xv):
        return jnp.maximum(xv @ w1.T + b1, 0.0) @ w2.T + b2

    # Small batch (single grid step, block overhangs the 8-row array).
    batch = 8
    x = jax.random.normal(kx, (batch, IN_F), jnp.float32)
    out = jax.block_until_ready(net_forward(x, w1, b1, w2, b2))
    assert out.shape == (batch, OUT_F), out.shape
    assert jnp.allclose(out, reference(x), atol=1e-4, rtol=1e-4)

    # Multi-step grid with a ragged final block (1000 = 3*256 + 232).
    big = 1000
    xb = jax.random.normal(kx, (big, IN_F), jnp.float32)
    outb = jax.block_until_ready(net_forward(xb, w1, b1, w2, b2, tb=256))
    assert outb.shape == (big, OUT_F)
    assert jnp.allclose(outb, reference(xb), atol=1e-4, rtol=1e-4)

    # Optional bf16 MXU operands (v7x/v6e cadence optimization), default tile logic.
    outc = jax.block_until_ready(
        net_forward(xb, w1, b1, w2, b2, mxu_dtype=jnp.bfloat16))
    assert outc.shape == (big, OUT_F)
    assert jnp.allclose(outc, reference(xb), atol=1e-1, rtol=1e-1)

    print("KERNEL_OK")
</pallas_src>

<mosaic_0001>
module attributes {stable_mosaic.version = 11 : i64} {
  func.func @_mlp_kernel(%arg0: i32, %arg1: memref<128x10xf32, #tpu.memory_space<vmem>>, %arg2: memref<20x10xf32, #tpu.memory_space<vmem>>, %arg3: memref<20x1xf32, #tpu.memory_space<vmem>>, %arg4: memref<20x1xf32, #tpu.memory_space<vmem>>, %arg5: memref<1xf32, #tpu.memory_space<smem>>, %arg6: memref<1x128xf32, #tpu.memory_space<vmem>>) attributes {dimension_semantics = [#tpu.dimension_semantics<parallel>], iteration_bounds = array<i64: 1>, scalar_prefetch = 0 : i64, scratch_operands = 0 : i64, tpu.core_type = #tpu.core_type<tc>, window_params = [{transform_indices = @transform_0, window_bounds = array<i64: 128, 10>}, {pipeline_mode = #tpu.pipeline_mode<synchronous>, transform_indices = @transform_1, window_bounds = array<i64: 20, 10>}, {pipeline_mode = #tpu.pipeline_mode<synchronous>, transform_indices = @transform_2, window_bounds = array<i64: 20, 1>}, {pipeline_mode = #tpu.pipeline_mode<synchronous>, transform_indices = @transform_3, window_bounds = array<i64: 20, 1>}, {transform_indices = @transform_4, window_bounds = array<i64: 1>}, {transform_indices = @transform_5, window_bounds = array<i64: 1, 128>}]} {
    %c0 = arith.constant 0 : index
    %c0_0 = arith.constant 0 : index
    %0 = vector.load %arg1[%c0, %c0_0] : memref<128x10xf32, #tpu.memory_space<vmem>>, vector<128x10xf32>
    %c0_1 = arith.constant 0 : index
    %c0_2 = arith.constant 0 : index
    %1 = vector.load %arg2[%c0_1, %c0_2] : memref<20x10xf32, #tpu.memory_space<vmem>>, vector<20x10xf32>
    %cst = arith.constant dense<0.000000e+00> : vector<20x128xf32>
    %2 = tpu.matmul %1, %0, %cst {dimension_numbers = #tpu.dot_dimension_numbers<[1], [1], [0], [0], [0, 0, 1, 0], [], []>} : vector<20x10xf32>, vector<128x10xf32>, vector<20x128xf32> -> vector<20x128xf32>
    %c0_3 = arith.constant 0 : index
    %c0_4 = arith.constant 0 : index
    %3 = vector.load %arg3[%c0_3, %c0_4] : memref<20x1xf32, #tpu.memory_space<vmem>>, vector<20x1xf32>
    %4 = vector.broadcast %3 : vector<20x1xf32> to vector<20x128xf32>
    %5 = arith.addf %2, %4 : vector<20x128xf32>
    %cst_5 = arith.constant 0.000000e+00 : f32
    %6 = vector.broadcast %cst_5 : f32 to vector<20x128xf32>
    %7 = arith.maximumf %5, %6 : vector<20x128xf32>
    %c0_6 = arith.constant 0 : index
    %c0_7 = arith.constant 0 : index
    %8 = vector.load %arg4[%c0_6, %c0_7] : memref<20x1xf32, #tpu.memory_space<vmem>>, vector<20x1xf32>
    %9 = vector.broadcast %8 : vector<20x1xf32> to vector<20x128xf32>
    %10 = arith.mulf %7, %9 : vector<20x128xf32>
    %cst_8 = arith.constant dense<0.000000e+00> : vector<128xf32>
    %11 = vector.multi_reduction <add>, %10, %cst_8 [0] : vector<20x128xf32> to vector<128xf32>
    %12 = vector.shape_cast %11 : vector<128xf32> to vector<1x128xf32>
    %c0_9 = arith.constant 0 : index
    %13 = memref.load %arg5[%c0_9] : memref<1xf32, #tpu.memory_space<smem>>
    %14 = vector.broadcast %13 : f32 to vector<1x128xf32>
    %15 = arith.addf %12, %14 : vector<1x128xf32>
    %c0_10 = arith.constant 0 : index
    %c0_11 = arith.constant 0 : index
    %16 = vector.load %arg6[%c0_10, %c0_11] : memref<1x128xf32, #tpu.memory_space<vmem>>, vector<1x128xf32>
    tpu.vector_store %arg6[%c0_10, %c0_11], %15 {strides = array<i32>} : memref<1x128xf32, #tpu.memory_space<vmem>>, vector<1x128xf32>,
    return
  }
  func.func @transform_0(%arg0: i32) -> (i32, i32) {
    %c0_i32 = arith.constant 0 : i32
    %c0_i32_0 = arith.constant 0 : i32
    return %arg0, %c0_i32 : i32, i32
  }
  func.func @transform_1(%arg0: i32) -> (i32, i32) {
    %c0_i32 = arith.constant 0 : i32
    %c0_i32_0 = arith.constant 0 : i32
    %c0_i32_1 = arith.constant 0 : i32
    return %c0_i32, %c0_i32_0 : i32, i32
  }
  func.func @transform_2(%arg0: i32) -> (i32, i32) {
    %c0_i32 = arith.constant 0 : i32
    %c0_i32_0 = arith.constant 0 : i32
    %c0_i32_1 = arith.constant 0 : i32
    return %c0_i32, %c0_i32_0 : i32, i32
  }
  func.func @transform_3(%arg0: i32) -> (i32, i32) {
    %c0_i32 = arith.constant 0 : i32
    %c0_i32_0 = arith.constant 0 : i32
    %c0_i32_1 = arith.constant 0 : i32
    return %c0_i32, %c0_i32_0 : i32, i32
  }
  func.func @transform_4(%arg0: i32) -> i32 {
    %c0_i32 = arith.constant 0 : i32
    %c0_i32_0 = arith.constant 0 : i32
    return %c0_i32 : i32
  }
  func.func @transform_5(%arg0: i32) -> (i32, i32) {
    %c0_i32 = arith.constant 0 : i32
    %c0_i32_0 = arith.constant 0 : i32
    return %c0_i32, %arg0 : i32, i32
  }
}

</mosaic_0001>

<llo_original>
// kernel: tpu_custom_call.1
$region0: #{tpu_custom_call.1}
  #allocation0 [shape = 'u32[]', space=smem, size = 0x4, offset = 0x4, fixed_abs, tag = 'smem constant byte address 0x4 - core index']
  #allocation1 [shape = 'u32[144,128]{1,0:T(1,128)}', space=vmem, size = 0x12000, scoped, tag = 'internal scratch']
  #allocation2 [shape = 'f32[1]{0:T(128)S(6)}', space=smem, size = 0x200, scoped, tag = 'scoped memory for tpu_custom_call.1']
  %s0 = inlined_call_operand.vmem [shape: f32[8,10], index: 0, kind: input, shape index: {}]
  %s1 = inlined_call_operand.vmem [shape: f32[20,10], index: 1, kind: input, shape index: {}]
  %s2 = inlined_call_operand.vmem [shape: f32[20,1], index: 2, kind: input, shape index: {}]
  %s3 = inlined_call_operand.vmem [shape: f32[20,1], index: 3, kind: input, shape index: {}]
  %s4 = inlined_call_operand.<no memory space> [shape: f32[1], index: 4, kind: input, shape index: {}]
  %s5 = inlined_call_operand.hbm [shape: f32[1,8], index: 5, kind: output, shape index: {}]
  %s6 = sld [smem:[#allocation0]]
  $region30: #{tpu_custom_call.1} parent=0
    _
  %s8 = ssub.s32 1, %s6
  %s9 = scalar_select 0, %s8, %s6
  %10 = sst [smem:[#allocation2]] %s4
  $region1: #{tpu_custom_call.1} parent=0
    #allocation3 [shape = 'u8[512]{0}', space=vmem, size = 0x400, scoped, tag = 'output window, operand 0, single buffered']
    #allocation4 [shape = 's32[1]{0}', space=sflag, size = 0x4, scoped, tag = 'scoped memory for tpu_custom_call.1']
    %11 = vsyncpa [#allocation4], 0
    // Predicated region
    $region2: #{tpu_custom_call.1} parent=1 // pred_check
      _
    $region3: #{tpu_custom_call.1} parent=1 // pred_check_branch
      %13 = sbr.rel (0) target = $region5
    $region4: #{tpu_custom_call.1} parent=1 // pred_region
      _
    $region5: #{tpu_custom_call.1} parent=1 // pred_fallthru
      _
    // Predicated region
    $region6: #{tpu_custom_call.1} parent=1 // pred_check
      _
    $region7: #{tpu_custom_call.1} parent=1 // pred_check_branch
      %15 = sbr.rel (0) target = $region9
    $region8: #{tpu_custom_call.1} parent=1 // pred_region
      _
    $region9: #{tpu_custom_call.1} parent=1 // pred_fallthru
      _
    // Predicated region
    $region10: #{tpu_custom_call.1} parent=1 // pred_check
      _
    $region11: #{tpu_custom_call.1} parent=1 // pred_check_branch
      %17 = sbr.rel (0) target = $region13
    $region12: #{tpu_custom_call.1} parent=1 // pred_region
      _
    $region13: #{tpu_custom_call.1} parent=1 // pred_fallthru
      _
    // Predicated region
    $region14: #{tpu_custom_call.1} parent=1 // pred_check
      _
    $region15: #{tpu_custom_call.1} parent=1 // pred_check_branch
      %19 = sbr.rel (0) target = $region17
    $region16: #{tpu_custom_call.1} parent=1 // pred_region
      _
    $region17: #{tpu_custom_call.1} parent=1 // pred_fallthru
      _
    // Predicated region
    $region18: #{tpu_custom_call.1} parent=1 // pred_check
      _
    $region19: #{tpu_custom_call.1} parent=1 // pred_check_branch
      %21 = sbr.rel (0) target = $region21
    $region20: #{tpu_custom_call.1} parent=1 // pred_region
      _
    $region21: #{tpu_custom_call.1} parent=1 // pred_fallthru
      _
    %v22 = vld [vmem:[%s0] sm:$0xff]
    %v23 = vld [vmem:[%s0 + $0x8] sm:$0xff]
    %v24 = vld [vmem:[%s0 + $0x10] sm:$0xff]
    %v25 = vld [vmem:[%s0 + $0x18] sm:$0xff]
    %v26 = vld [vmem:[%s0 + $0x20] sm:$0xff]
    %v27 = vld [vmem:[%s0 + $0x28] sm:$0xff]
    %v28 = vld [vmem:[%s0 + $0x30] sm:$0xff]
    %v29 = vld [vmem:[%s0 + $0x38] sm:$0xff]
    %v30 = vld [vmem:[%s0 + $0x40] sm:$0xff]
    %v31 = vld [vmem:[%s0 + $0x48] sm:$0xff]
    %v32 = vld [vmem:[%s0 + $0x50] sm:$0xff]
    %v33 = vld [vmem:[%s0 + $0x58] sm:$0xff]
    %v34 = vld [vmem:[%s0 + $0x60] sm:$0xff]
    %v35 = vld [vmem:[%s0 + $0x68] sm:$0xff]
    %v36 = vld [vmem:[%s0 + $0x70] sm:$0xff]
    %v37 = vld [vmem:[%s0 + $0x78] sm:$0xff]
    %v38 = vld [vmem:[%s1] sm:$0xff]
    %v39 = vld [vmem:[%s1 + $0x8] sm:$0xff]
    %v40 = vld [vmem:[%s1 + $0x10] sm:$0xf]
    %v41 = vld [vmem:[%s2] sm:$0xff]
    %v42 = vld [vmem:[%s2 + $0x8] sm:$0xff]
    %v43 = vld [vmem:[%s2 + $0x10] sm:$0xf]
    %45 = vset.pattern.permute.xlu0 0
    %46 = vperm.xlu0 %45, %v41
    %v47 = vpop.permute.xlu0 %46
    %50 = vset.pattern.permute.xlu0 0
    %51 = vperm.xlu0 %50, %v42
    %v52 = vpop.permute.xlu0 %51
    %55 = vset.pattern.permute.xlu0 0
    %56 = vperm.xlu0 %55, %v43
    %v57 = vpop.permute.xlu0 %56
    %vm59 = vcmask 80896
    %v61 = vsel %vm59, %v38, 0
    %v64 = vsel %vm59, %v39, 0
    %v67 = vsel %vm59, %v40, 0
    %v70 = vsel %vm59, %v22, 0
    %v73 = vsel %vm59, %v23, 0
    %v76 = vsel %vm59, %v24, 0
    %v79 = vsel %vm59, %v25, 0
    %v82 = vsel %vm59, %v26, 0
    %v85 = vsel %vm59, %v27, 0
    %v88 = vsel %vm59, %v28, 0
    %v91 = vsel %vm59, %v29, 0
    %v94 = vsel %vm59, %v30, 0
    %v97 = vsel %vm59, %v31, 0
    %v100 = vsel %vm59, %v32, 0
    %v103 = vsel %vm59, %v33, 0
    %v106 = vsel %vm59, %v34, 0
    %v109 = vsel %vm59, %v35, 0
    %v112 = vsel %vm59, %v36, 0
    %v115 = vsel %vm59, %v37, 0
    %117 = vmatprep.subr.mxu0 0.0
    %118 = vmatpush1.xpose.msra.mxu0 %v70
    %119 = vmatprep.subr.mxu0 0.0
    %120 = vmatpush1.xpose.msra.mxu0 %v73
    %121 = vmatprep.subr.mxu0 0.0
    %122 = vmatpush1.xpose.msra.mxu0 %v76
    %123 = vmatprep.subr.mxu0 0.0
    %124 = vmatpush1.xpose.msra.mxu0 %v79
    %125 = vmatprep.subr.mxu0 0.0
    %126 = vmatpush1.xpose.msra.mxu0 %v82
    %127 = vmatprep.subr.mxu0 0.0
    %128 = vmatpush1.xpose.msra.mxu0 %v85
    %129 = vmatprep.subr.mxu0 0.0
    %130 = vmatpush1.xpose.msra.mxu0 %v88
    %131 = vmatprep.subr.mxu0 0.0
    %132 = vmatpush1.xpose.msra.mxu0 %v91
    %133 = vmatprep.subr.mxu0 0.0
    %134 = vmatpush1.xpose.msra.mxu0 %v94
    %135 = vmatprep.subr.mxu0 0.0
    %136 = vmatpush1.xpose.msra.mxu0 %v97
    %137 = vmatprep.subr.mxu0 0.0
    %138 = vmatpush1.xpose.msra.mxu0 %v100
    %139 = vmatprep.subr.mxu0 0.0
    %140 = vmatpush1.xpose.msra.mxu0 %v103
    %141 = vmatprep.subr.mxu0 0.0
    %142 = vmatpush1.xpose.msra.mxu0 %v106
    %143 = vmatprep.subr.mxu0 0.0
    %144 = vmatpush1.xpose.msra.mxu0 %v109
    %145 = vmatprep.subr.mxu0 0.0
    %146 = vmatpush1.xpose.msra.mxu0 %v112
    %147 = vmatprep.subr.mxu0 0.0
    %148 = vmatpush1.xpose.msra.mxu0 %v115
    %149 = vmatprep.subr.mxu0 0.0
    %150 = vmatpush1.xpose.msra.mxu0 0.0
    %151 = vmatprep.subr.mxu0 0.0
    %152 = vmatpush1.xpose.msra.mxu0 0.0
    %153 = vmatprep.subr.mxu0 0.0
    %154 = vmatpush1.xpose.msra.mxu0 0.0
    %155 = vmatprep.subr.mxu0 0.0
    %156 = vmatpush1.xpose.msra.mxu0 0.0
    %157 = vmatprep.subr.mxu0 0.0
    %158 = vmatpush1.xpose.msra.mxu0 0.0
    %159 = vmatprep.subr.mxu0 0.0
    %160 = vmatpush1.xpose.msra.mxu0 0.0
    %161 = vmatprep.subr.mxu0 0.0
    %162 = vmatpush1.xpose.msra.mxu0 0.0
    %163 = vmatprep.subr.mxu0 0.0
    %164 = vmatpush1.xpose.msra.mxu0 0.0
    %165 = vmatprep.subr.mxu0 0.0
    %166 = vmatpush1.xpose.msra.mxu0 0.0
    %167 = vmatprep.subr.mxu0 0.0
    %168 = vmatpush1.xpose.msra.mxu0 0.0
    %169 = vmatprep.subr.mxu0 0.0
    %170 = vmatpush1.xpose.msra.mxu0 0.0
    %171 = vmatprep.subr.mxu0 0.0
    %172 = vmatpush1.xpose.msra.mxu0 0.0
    %173 = vmatprep.subr.mxu0 0.0
    %174 = vmatpush1.xpose.msra.mxu0 0.0
    %175 = vmatprep.subr.mxu0 0.0
    %176 = vmatpush1.xpose.msra.mxu0 0.0
    %177 = vmatprep.subr.mxu0 0.0
    %178 = vmatpush1.xpose.msra.mxu0 0.0
    %179 = vmatprep.subr.mxu0 0.0
    %180 = vmatpush1.xpose.msra.mxu0 0.0
    %181 = vmatprep.mubr.f32.mxu0 0.0
    %182 = vmatmul.mubr.f32.gmra.mrb[0].mxu0 %v61
    %v183 = vpop.f32.mrb[0].mxu0
    %v184 = vadd.f32 %v47, %v183
    %v185 = vpop.f32.mrb[0].mxu0
    %186 = vmatprep.mubr.f32.mxu0 0.0
    %187 = vmatmul.mubr.f32.gmra.mrb[0].mxu0 %v64
    %v188 = vpop.f32.mrb[0].mxu0
    %v189 = vadd.f32 %v52, %v188
    %v190 = vpop.f32.mrb[0].mxu0
    %191 = vmatprep.mubr.f32.mxu0 0.0
    %192 = vmatmul.mubr.f32.gmra.mrb[0].mxu0 %v67
    %v193 = vpop.f32.mrb[0].mxu0
    %v194 = vadd.f32 %v57, %v193
    %v195 = vpop.f32.mrb[0].mxu0
    %196 = vdwg.mxu0
    %v197 = vmax.f32 %v184, 0.0
    %v198 = vmax.f32 %v189, 0.0
    %v199 = vmax.f32 %v194, 0.0
    %v200 = vld [vmem:[%s3] sm:$0xff]
    %v201 = vld [vmem:[%s3 + $0x8] sm:$0xff]
    %v202 = vld [vmem:[%s3 + $0x10] sm:$0xf]
    %204 = vset.pattern.permute.xlu0 0
    %205 = vperm.xlu0 %204, %v200
    %v206 = vpop.permute.xlu0 %205
    %209 = vset.pattern.permute.xlu0 0
    %210 = vperm.xlu0 %209, %v201
    %v211 = vpop.permute.xlu0 %210
    %214 = vset.pattern.permute.xlu0 0
    %215 = vperm.xlu0 %214, %v202
    %v216 = vpop.permute.xlu0 %215
    %v218 = vmul.f32 %v197, %v206
    %v219 = vmul.f32 %v198, %v211
    %v220 = vmul.f32 %v199, %v216
    %v221 = vadd.f32 %v218, %v219
    %vm222 = vcmask 1043456
    %v223 = vsel %vm222, %v220, 0.0
    %v224 = vadd.f32 %v221, %v223
    %v225 = vrot.slane %v224, 4
    %v226 = vadd.f32 %v224, %v225
    %v227 = vrot.slane %v226, 2
    %v228 = vadd.f32 %v226, %v227
    %v229 = vrot.slane %v228, 1
    %v230 = vadd.f32 %v228, %v229
    %s231 = sld [smem:[#allocation2]]
    %v232 = vstv %s231
    %v233 = vadd.f32 %v230, %v232
    %234 = vst [vmem:[#allocation3] sm:$0x1] %v233
    // Predicated region
    $region22: #{tpu_custom_call.1} parent=1 // pred_check
      _
    $region23: #{tpu_custom_call.1} parent=1 // pred_check_branch
      %236 = sbr.rel (0) target = $region25
    $region24: #{tpu_custom_call.1} parent=1 // pred_region
      %s238 = ssub.s32 16, 16
      %239 = vsyncadd [#allocation4], %s238
      %s241 = sshll.u32 [#allocation3], 4
      %s242 = int_to_ptr.vmem [resolvable:$true] %s241
      %244 = dma.vmem_to_hbm [thread:$0]  %s242, 16, %s5, [#allocation4]
    $region25: #{tpu_custom_call.1} parent=1 // pred_fallthru
      _
    // Predicated region
    $region26: #{tpu_custom_call.1} parent=1 // pred_check
      _
    $region27: #{tpu_custom_call.1} parent=1 // pred_check_branch
      %246 = sbr.rel (0) target = $region29
    $region28: #{tpu_custom_call.1} parent=1 // pred_region
      %247 = dma.done [#allocation4], 16
    $region29: #{tpu_custom_call.1} parent=1 // pred_fallthru
      _
    %248 = vsyncpa [#allocation4], 1

</llo_original>
